<compile_context>
chip_gen: v7x
topology: tpu7x:2x2x1
jax: 0.10.0
libtpu: 0.0.40
codegen_flags: <defaults>
</compile_context>

<pallas_src>
import functools

import jax
import jax.numpy as jnp
from jax import lax
from jax.experimental import pallas as pl
from jax.experimental.pallas import tpu as pltpu


# ------------------------------ Pallas kernel ------------------------------ #

def _maskdown_kernel(*refs, eps, slope, use_mask, has_1x1):
    """Fused maskDown forward for one sample (grid iterates over batch)."""
    it = iter(refs)
    xp_ref = next(it)          # [1, P, K1p]  bf16 im2col patches of x
    w1_ref = next(it)          # [K1p, Cp]    bf16 feature conv weight (no bias)
    if use_mask:
        mp_ref = next(it)      # [1, P, Kmp]  bf16 patches of pooled mask
        wm_ref = next(it)      # [Kmp, Cp]    bf16 attention conv weight
        bm_ref = next(it)      # [1, Cp]      f32  attention conv bias
        bg_ref = next(it)      # [1, P, Cbp]  bf16 (or f32 if no 1x1) bg
        if has_1x1:
            w1x1_ref = next(it)  # [Cbp, Cp]  bf16
            b1x1_ref = next(it)  # [1, Cp]    f32
    out_ref = next(it)         # [1, P, Cp]   f32

    # --- feature path: conv-as-matmul (bf16 MXU, f32 acc), bias=False ---
    f = jnp.dot(xp_ref[0], w1_ref[...], preferred_element_type=jnp.float32)

    if eps is not None:
        # InstanceNorm2d(eps): per-sample, per-channel over spatial P (biased var)
        mu = jnp.mean(f, axis=0, keepdims=True)
        var = jnp.mean((f - mu) ** 2, axis=0, keepdims=True)
        f = (f - mu) * lax.rsqrt(var + eps)

    # LeakyReLU(0.2)
    f = jnp.where(f >= 0.0, f, slope * f)
    # TODO(synk): nn.Dropout(0.1) omitted (inference / eval mode -> identity).

    if use_mask:
        # --- BRM attention: conv(3x3) + bias + sigmoid (exp -> EUP slot) ---
        a = jnp.dot(mp_ref[0], wm_ref[...], preferred_element_type=jnp.float32)
        a = a + bm_ref[...]
        a = 1.0 / (1.0 + jnp.exp(-a))

        # --- background branch: nearest-downsampled bg (+ optional 1x1 conv) ---
        if has_1x1:
            bgv = jnp.dot(bg_ref[0], w1x1_ref[...],
                          preferred_element_type=jnp.float32)
            bgv = bgv + b1x1_ref[...]
        else:
            bgv = bg_ref[0].astype(jnp.float32)

        f = a * f + (1.0 - a) * bgv

    out_ref[0] = f


# ------------------------------- JAX glue ---------------------------------- #

def _pad_axis(a, axis, mult):
    pad = (-a.shape[axis]) % mult
    if pad == 0:
        return a
    widths = [(0, 0)] * a.ndim
    widths[axis] = (0, pad)
    return jnp.pad(a, widths)


def _extract_patches(x, kh, kw, stride, pad):
    """x: [N,H,W,C] -> ([N, Ho*Wo, kh*kw*C], Ho, Wo)  (glue / data movement)."""
    n, h, w, c = x.shape
    xp = jnp.pad(x, ((0, 0), (pad, pad), (pad, pad), (0, 0)))
    hp, wp = h + 2 * pad, w + 2 * pad
    ho = (hp - kh) // stride + 1
    wo = (wp - kw) // stride + 1
    cols = []
    for i in range(kh):
        for j in range(kw):
            cols.append(xp[:, i:i + stride * (ho - 1) + 1:stride,
                           j:j + stride * (wo - 1) + 1:stride, :])
    patches = jnp.stack(cols, axis=3)                     # [N,Ho,Wo,KH*KW,C]
    return patches.reshape(n, ho * wo, kh * kw * c), ho, wo


def maskdown_forward(params, bg_nchw, x_nchw, z, mask_nchw):
    """maskDown.forward(bg, x, z, mask).  NCHW in / NCHW out.  z unused (noise=False)."""
    del z
    cfg = params["cfg"]
    outc, ks = cfg["outc"], cfg["ks"]
    eps, slope = cfg["eps"], cfg["slope"]
    use_mask, has_1x1 = cfg["use_mask"], cfg["has_1x1"]

    x = jnp.transpose(x_nchw, (0, 2, 3, 1)).astype(jnp.float32)       # NHWC
    n = x.shape[0]
    cp = ((outc + 127) // 128) * 128

    # feature conv patches: 3x3, stride 2, pad 1
    xpat, ho, wo = _extract_patches(x, 3, 3, 2, 1)                    # [N,P,9*inc]
    p = ho * wo
    xpat_in = _pad_axis(xpat, -1, 128).astype(jnp.bfloat16)
    k1p = xpat_in.shape[-1]
    w1_in = _pad_axis(_pad_axis(params["w1"].reshape(-1, outc), 0, 128),
                      1, 128).astype(jnp.bfloat16)

    inputs = [xpat_in, w1_in]
    in_specs = [
        pl.BlockSpec((1, p, k1p), lambda i: (i, 0, 0)),
        pl.BlockSpec((k1p, cp), lambda i: (0, 0)),
    ]

    if use_mask:
        mask = jnp.transpose(mask_nchw, (0, 2, 3, 1)).astype(jnp.float32)
        bg = jnp.transpose(bg_nchw, (0, 2, 3, 1)).astype(jnp.float32)
        mh, mw, c = mask.shape[1], mask.shape[2], mask.shape[3]

        # AvgPool2d(ks, ks) + nearest downsample: tiny memory-bound glue.
        pooled = mask.reshape(n, mh // ks, ks, mw // ks, ks, c).mean(axis=(2, 4))
        mpat, mho, mwo = _extract_patches(pooled, 3, 3, 1, 1)         # [N,P,9*c]
        assert mho == ho and mwo == wo, "mask/feature spatial mismatch"
        mpat_in = _pad_axis(mpat, -1, 128).astype(jnp.bfloat16)
        kmp = mpat_in.shape[-1]
        wm_in = _pad_axis(_pad_axis(params["wm"].reshape(-1, outc), 0, 128),
                          1, 128).astype(jnp.bfloat16)
        bm_in = _pad_axis(params["bm"].reshape(1, outc), 1, 128)      # f32

        bgd = bg[:, ::ks, ::ks, :]                                    # nearest
        assert bgd.shape[1] == ho and bgd.shape[2] == wo
        bgd = bgd.reshape(n, p, -1)

        inputs += [mpat_in, wm_in, bm_in]
        in_specs += [
            pl.BlockSpec((1, p, kmp), lambda i: (i, 0, 0)),
            pl.BlockSpec((kmp, cp), lambda i: (0, 0)),
            pl.BlockSpec((1, cp), lambda i: (0, 0)),
        ]

        if has_1x1:
            cin = bgd.shape[-1]
            bgd_in = _pad_axis(bgd, -1, 128).astype(jnp.bfloat16)
            cbp = bgd_in.shape[-1]
            w1x1_in = _pad_axis(_pad_axis(params["w1x1"].reshape(cin, outc),
                                          0, 128), 1, 128).astype(jnp.bfloat16)
            b1x1_in = _pad_axis(params["b1x1"].reshape(1, outc), 1, 128)
            inputs += [bgd_in, w1x1_in, b1x1_in]
            in_specs += [
                pl.BlockSpec((1, p, cbp), lambda i: (i, 0, 0)),
                pl.BlockSpec((cbp, cp), lambda i: (0, 0)),
                pl.BlockSpec((1, cp), lambda i: (0, 0)),
            ]
        else:
            bgd_in = _pad_axis(bgd, -1, 128)                          # f32, C==outc
            inputs.append(bgd_in)
            in_specs.append(pl.BlockSpec((1, p, cp), lambda i: (i, 0, 0)))

    kernel = functools.partial(_maskdown_kernel, eps=eps, slope=slope,
                               use_mask=use_mask, has_1x1=has_1x1)

    out = pl.pallas_call(
        kernel,
        out_shape=jax.ShapeDtypeStruct((n, p, cp), jnp.float32),
        grid=(n,),
        in_specs=in_specs,
        out_specs=pl.BlockSpec((1, p, cp), lambda i: (i, 0, 0)),
        compiler_params=pltpu.CompilerParams(
            dimension_semantics=("parallel",)),
    )(*inputs)

    out = out[..., :outc].reshape(n, ho, wo, outc)
    return jnp.transpose(out, (0, 3, 1, 2))                           # NCHW


# --------------------------- parameters (PyTorch init) ---------------------- #

def _conv_init(key, kh, kw, cin, cout, bias=True):
    k1, k2 = jax.random.split(key)
    bound = 1.0 / float(kh * kw * cin) ** 0.5
    w = jax.random.uniform(k1, (kh, kw, cin, cout), jnp.float32, -bound, bound)
    if not bias:
        return w
    b = jax.random.uniform(k2, (cout,), jnp.float32, -bound, bound)
    return w, b


def init_params(key, img_shape, inc, outc, ks, normalize=True, use_mask=True):
    c = img_shape[0]
    k1, k2, k3 = jax.random.split(key, 3)
    params = {"w1": _conv_init(k1, 3, 3, inc, outc, bias=False)}
    has_1x1 = False
    if use_mask:
        wm, bm = _conv_init(k2, 3, 3, c, outc)
        params["wm"], params["bm"] = wm, bm
        has_1x1 = (c != outc)
        if has_1x1:
            w1x1, b1x1 = _conv_init(k3, 1, 1, c, outc)
            params["w1x1"], params["b1x1"] = w1x1, b1x1
    params["cfg"] = dict(ks=ks, outc=outc, eps=(0.8 if normalize else None),
                         slope=0.2, use_mask=use_mask, has_1x1=has_1x1)
    return params


# ------------------------- pure-JAX reference check ------------------------ #

def _ref_conv(x, w, b, stride, pad):
    out = lax.conv_general_dilated(
        x, w, (stride, stride), ((pad, pad), (pad, pad)),
        dimension_numbers=("NCHW", "HWIO", "NCHW"),
        precision=lax.Precision.HIGHEST)
    if b is not None:
        out = out + b.reshape(1, -1, 1, 1)
    return out


def maskdown_reference(params, bg, x, z, mask):
    del z
    cfg = params["cfg"]
    f = _ref_conv(x, params["w1"], None, 2, 1)
    if cfg["eps"] is not None:
        mu = jnp.mean(f, axis=(2, 3), keepdims=True)
        var = jnp.mean((f - mu) ** 2, axis=(2, 3), keepdims=True)
        f = (f - mu) / jnp.sqrt(var + cfg["eps"])
    f = jnp.where(f >= 0.0, f, cfg["slope"] * f)
    if cfg["use_mask"]:
        ks = cfg["ks"]
        n, c, mh, mw = mask.shape
        pooled = mask.reshape(n, c, mh // ks, ks, mw // ks, ks).mean(axis=(3, 5))
        a = jax.nn.sigmoid(_ref_conv(pooled, params["wm"], params["bm"], 1, 1))
        bgd = bg[:, :, ::ks, ::ks]
        if cfg["has_1x1"]:
            bgd = _ref_conv(bgd, params["w1x1"], params["b1x1"], 1, 0)
        f = a * f + (1.0 - a) * bgd
    return f


# ----------------------------------- main ----------------------------------- #

if __name__ == "__main__":
    key = jax.random.PRNGKey(0)
    kbg, kx, km, kp = jax.random.split(key, 4)

    N, C, H, W = 2, 4, 16, 16        # img_shape = (C, H, W)
    INC, OUTC, KS = 4, 32, 2

    bg = jax.random.normal(kbg, (N, C, H, W), jnp.float32)
    x = jax.random.normal(kx, (N, INC, H, W), jnp.float32)
    mask = jax.random.uniform(km, (N, C, H, W), jnp.float32)
    z = None                          # unused: noise=False in maskDown defaults

    params = init_params(kp, img_shape=(C, H, W), inc=INC, outc=OUTC, ks=KS)

    out = maskdown_forward(params, bg, x, z, mask)
    out = jax.block_until_ready(out)

    ref = maskdown_reference(params, bg, x, z, mask)
    assert out.shape == (N, OUTC, H // 2, W // 2), out.shape
    assert ref.shape == out.shape
    assert bool(jnp.all(jnp.isfinite(out)))
    max_err = float(jnp.max(jnp.abs(out - ref)))
    # bf16 MXU inputs with f32 accumulation vs an f32 HIGHEST-precision
    # reference -> tolerance loosened accordingly (per the perf review).
    assert max_err < 3e-2, f"max abs err vs reference: {max_err}"

    print("KERNEL_OK")
</pallas_src>

<mosaic_0001>
module attributes {stable_mosaic.version = 11 : i64} {
  func.func @_maskdown_kernel(%arg0: i32, %arg1: memref<1x64x128xbf16, #tpu.memory_space<vmem>>, %arg2: memref<128x128xbf16, #tpu.memory_space<vmem>>, %arg3: memref<1x64x128xbf16, #tpu.memory_space<vmem>>, %arg4: memref<128x128xbf16, #tpu.memory_space<vmem>>, %arg5: memref<1x128xf32, #tpu.memory_space<vmem>>, %arg6: memref<1x64x128xbf16, #tpu.memory_space<vmem>>, %arg7: memref<128x128xbf16, #tpu.memory_space<vmem>>, %arg8: memref<1x128xf32, #tpu.memory_space<vmem>>, %arg9: memref<1x64x128xf32, #tpu.memory_space<vmem>>) attributes {dimension_semantics = [#tpu.dimension_semantics<parallel>], iteration_bounds = array<i64: 2>, scalar_prefetch = 0 : i64, scratch_operands = 0 : i64, tpu.core_type = #tpu.core_type<tc>, window_params = [{transform_indices = @transform_0, window_bounds = array<i64: 1, 64, 128>}, {pipeline_mode = #tpu.pipeline_mode<synchronous>, transform_indices = @transform_1, window_bounds = array<i64: 128, 128>}, {transform_indices = @transform_2, window_bounds = array<i64: 1, 64, 128>}, {pipeline_mode = #tpu.pipeline_mode<synchronous>, transform_indices = @transform_3, window_bounds = array<i64: 128, 128>}, {pipeline_mode = #tpu.pipeline_mode<synchronous>, transform_indices = @transform_4, window_bounds = array<i64: 1, 128>}, {transform_indices = @transform_5, window_bounds = array<i64: 1, 64, 128>}, {pipeline_mode = #tpu.pipeline_mode<synchronous>, transform_indices = @transform_6, window_bounds = array<i64: 128, 128>}, {pipeline_mode = #tpu.pipeline_mode<synchronous>, transform_indices = @transform_7, window_bounds = array<i64: 1, 128>}, {transform_indices = @transform_8, window_bounds = array<i64: 1, 64, 128>}]} {
    %c0 = arith.constant 0 : index
    %c0_0 = arith.constant 0 : index
    %c0_1 = arith.constant 0 : index
    %0 = vector.load %arg1[%c0, %c0_0, %c0_1] : memref<1x64x128xbf16, #tpu.memory_space<vmem>>, vector<1x64x128xbf16>
    %1 = vector.shape_cast %0 : vector<1x64x128xbf16> to vector<64x128xbf16>
    %c0_2 = arith.constant 0 : index
    %c0_3 = arith.constant 0 : index
    %2 = vector.load %arg2[%c0_2, %c0_3] : memref<128x128xbf16, #tpu.memory_space<vmem>>, vector<128x128xbf16>
    %cst = arith.constant dense<0.000000e+00> : vector<64x128xf32>
    %3 = tpu.matmul %1, %2, %cst {dimension_numbers = #tpu.dot_dimension_numbers<[1], [0], [0], [1], [0, 0, 1, 1], [], []>} : vector<64x128xbf16>, vector<128x128xbf16>, vector<64x128xf32> -> vector<64x128xf32>
    %cst_4 = arith.constant dense<0.000000e+00> : vector<128xf32>
    %4 = vector.multi_reduction <add>, %3, %cst_4 [0] : vector<64x128xf32> to vector<128xf32>
    %5 = vector.shape_cast %4 : vector<128xf32> to vector<1x128xf32>
    %cst_5 = arith.constant 6.400000e+01 : f32
    %6 = vector.broadcast %cst_5 : f32 to vector<1x128xf32>
    %7 = arith.divf %5, %6 : vector<1x128xf32>
    %8 = vector.broadcast %7 : vector<1x128xf32> to vector<64x128xf32>
    %9 = arith.subf %3, %8 : vector<64x128xf32>
    %10 = arith.mulf %9, %9 : vector<64x128xf32>
    %cst_6 = arith.constant dense<0.000000e+00> : vector<128xf32>
    %11 = vector.multi_reduction <add>, %10, %cst_6 [0] : vector<64x128xf32> to vector<128xf32>
    %12 = vector.shape_cast %11 : vector<128xf32> to vector<1x128xf32>
    %cst_7 = arith.constant 6.400000e+01 : f32
    %13 = vector.broadcast %cst_7 : f32 to vector<1x128xf32>
    %14 = arith.divf %12, %13 : vector<1x128xf32>
    %15 = vector.broadcast %7 : vector<1x128xf32> to vector<64x128xf32>
    %16 = arith.subf %3, %15 : vector<64x128xf32>
    %cst_8 = arith.constant 8.000000e-01 : f32
    %17 = vector.broadcast %cst_8 : f32 to vector<1x128xf32>
    %18 = arith.addf %14, %17 : vector<1x128xf32>
    %19 = math.rsqrt %18 : vector<1x128xf32>
    %20 = vector.broadcast %19 : vector<1x128xf32> to vector<64x128xf32>
    %21 = arith.mulf %16, %20 : vector<64x128xf32>
    %cst_9 = arith.constant 0.000000e+00 : f32
    %22 = vector.broadcast %cst_9 : f32 to vector<64x128xf32>
    %23 = arith.cmpf oge, %21, %22 : vector<64x128xf32>
    %cst_10 = arith.constant 2.000000e-01 : f32
    %24 = vector.broadcast %cst_10 : f32 to vector<64x128xf32>
    %25 = arith.mulf %24, %21 : vector<64x128xf32>
    %26 = arith.select %23, %21, %25 : vector<64x128xi1>, vector<64x128xf32>
    %c0_11 = arith.constant 0 : index
    %c0_12 = arith.constant 0 : index
    %c0_13 = arith.constant 0 : index
    %27 = vector.load %arg3[%c0_11, %c0_12, %c0_13] : memref<1x64x128xbf16, #tpu.memory_space<vmem>>, vector<1x64x128xbf16>
    %28 = vector.shape_cast %27 : vector<1x64x128xbf16> to vector<64x128xbf16>
    %c0_14 = arith.constant 0 : index
    %c0_15 = arith.constant 0 : index
    %29 = vector.load %arg4[%c0_14, %c0_15] : memref<128x128xbf16, #tpu.memory_space<vmem>>, vector<128x128xbf16>
    %cst_16 = arith.constant dense<0.000000e+00> : vector<64x128xf32>
    %30 = tpu.matmul %28, %29, %cst_16 {dimension_numbers = #tpu.dot_dimension_numbers<[1], [0], [0], [1], [0, 0, 1, 1], [], []>} : vector<64x128xbf16>, vector<128x128xbf16>, vector<64x128xf32> -> vector<64x128xf32>
    %c0_17 = arith.constant 0 : index
    %c0_18 = arith.constant 0 : index
    %31 = vector.load %arg5[%c0_17, %c0_18] : memref<1x128xf32, #tpu.memory_space<vmem>>, vector<1x128xf32>
    %32 = vector.broadcast %31 : vector<1x128xf32> to vector<64x128xf32>
    %33 = arith.addf %30, %32 : vector<64x128xf32>
    %cst_19 = arith.constant 0.000000e+00 : f32
    %34 = vector.broadcast %cst_19 : f32 to vector<64x128xf32>
    %35 = arith.subf %34, %33 : vector<64x128xf32>
    %36 = math.exp %35 : vector<64x128xf32>
    %cst_20 = arith.constant 1.000000e+00 : f32
    %37 = vector.broadcast %cst_20 : f32 to vector<64x128xf32>
    %38 = arith.addf %37, %36 : vector<64x128xf32>
    %cst_21 = arith.constant 1.000000e+00 : f32
    %39 = vector.broadcast %cst_21 : f32 to vector<64x128xf32>
    %40 = arith.divf %39, %38 : vector<64x128xf32>
    %c0_22 = arith.constant 0 : index
    %c0_23 = arith.constant 0 : index
    %c0_24 = arith.constant 0 : index
    %41 = vector.load %arg6[%c0_22, %c0_23, %c0_24] : memref<1x64x128xbf16, #tpu.memory_space<vmem>>, vector<1x64x128xbf16>
    %42 = vector.shape_cast %41 : vector<1x64x128xbf16> to vector<64x128xbf16>
    %c0_25 = arith.constant 0 : index
    %c0_26 = arith.constant 0 : index
    %43 = vector.load %arg7[%c0_25, %c0_26] : memref<128x128xbf16, #tpu.memory_space<vmem>>, vector<128x128xbf16>
    %cst_27 = arith.constant dense<0.000000e+00> : vector<64x128xf32>
    %44 = tpu.matmul %42, %43, %cst_27 {dimension_numbers = #tpu.dot_dimension_numbers<[1], [0], [0], [1], [0, 0, 1, 1], [], []>} : vector<64x128xbf16>, vector<128x128xbf16>, vector<64x128xf32> -> vector<64x128xf32>
    %c0_28 = arith.constant 0 : index
    %c0_29 = arith.constant 0 : index
    %45 = vector.load %arg8[%c0_28, %c0_29] : memref<1x128xf32, #tpu.memory_space<vmem>>, vector<1x128xf32>
    %46 = vector.broadcast %45 : vector<1x128xf32> to vector<64x128xf32>
    %47 = arith.addf %44, %46 : vector<64x128xf32>
    %48 = arith.mulf %40, %26 : vector<64x128xf32>
    %cst_30 = arith.constant 1.000000e+00 : f32
    %49 = vector.broadcast %cst_30 : f32 to vector<64x128xf32>
    %50 = arith.subf %49, %40 : vector<64x128xf32>
    %51 = arith.mulf %50, %47 : vector<64x128xf32>
    %52 = arith.addf %48, %51 : vector<64x128xf32>
    %c0_31 = arith.constant 0 : index
    %c0_32 = arith.constant 0 : index
    %c0_33 = arith.constant 0 : index
    %53 = vector.load %arg9[%c0_31, %c0_32, %c0_33] : memref<1x64x128xf32, #tpu.memory_space<vmem>>, vector<1x64x128xf32>
    %54 = vector.shape_cast %53 : vector<1x64x128xf32> to vector<64x128xf32>
    %55 = vector.shape_cast %52 : vector<64x128xf32> to vector<1x64x128xf32>
    tpu.vector_store %arg9[%c0_31, %c0_32, %c0_33], %55 {strides = array<i32>} : memref<1x64x128xf32, #tpu.memory_space<vmem>>, vector<1x64x128xf32>,
    return
  }
  func.func @transform_0(%arg0: i32) -> (i32, i32, i32) {
    %c0_i32 = arith.constant 0 : i32
    %c0_i32_0 = arith.constant 0 : i32
    %c0_i32_1 = arith.constant 0 : i32
    return %arg0, %c0_i32, %c0_i32_0 : i32, i32, i32
  }
  func.func @transform_1(%arg0: i32) -> (i32, i32) {
    %c0_i32 = arith.constant 0 : i32
    %c0_i32_0 = arith.constant 0 : i32
    %c0_i32_1 = arith.constant 0 : i32
    return %c0_i32, %c0_i32_0 : i32, i32
  }
  func.func @transform_2(%arg0: i32) -> (i32, i32, i32) {
    %c0_i32 = arith.constant 0 : i32
    %c0_i32_0 = arith.constant 0 : i32
    %c0_i32_1 = arith.constant 0 : i32
    return %arg0, %c0_i32, %c0_i32_0 : i32, i32, i32
  }
  func.func @transform_3(%arg0: i32) -> (i32, i32) {
    %c0_i32 = arith.constant 0 : i32
    %c0_i32_0 = arith.constant 0 : i32
    %c0_i32_1 = arith.constant 0 : i32
    return %c0_i32, %c0_i32_0 : i32, i32
  }
  func.func @transform_4(%arg0: i32) -> (i32, i32) {
    %c0_i32 = arith.constant 0 : i32
    %c0_i32_0 = arith.constant 0 : i32
    %c0_i32_1 = arith.constant 0 : i32
    return %c0_i32, %c0_i32_0 : i32, i32
  }
  func.func @transform_5(%arg0: i32) -> (i32, i32, i32) {
    %c0_i32 = arith.constant 0 : i32
    %c0_i32_0 = arith.constant 0 : i32
    %c0_i32_1 = arith.constant 0 : i32
    return %arg0, %c0_i32, %c0_i32_0 : i32, i32, i32
  }
  func.func @transform_6(%arg0: i32) -> (i32, i32) {
    %c0_i32 = arith.constant 0 : i32
    %c0_i32_0 = arith.constant 0 : i32
    %c0_i32_1 = arith.constant 0 : i32
    return %c0_i32, %c0_i32_0 : i32, i32
  }
  func.func @transform_7(%arg0: i32) -> (i32, i32) {
    %c0_i32 = arith.constant 0 : i32
    %c0_i32_0 = arith.constant 0 : i32
    %c0_i32_1 = arith.constant 0 : i32
    return %c0_i32, %c0_i32_0 : i32, i32
  }
  func.func @transform_8(%arg0: i32) -> (i32, i32, i32) {
    %c0_i32 = arith.constant 0 : i32
    %c0_i32_0 = arith.constant 0 : i32
    %c0_i32_1 = arith.constant 0 : i32
    return %arg0, %c0_i32, %c0_i32_0 : i32, i32, i32
  }
}

</mosaic_0001>

<llo_original>
// kernel: tpu_custom_call.1
$region0: #{tpu_custom_call.1}
  #allocation0 [shape = 'u32[]', space=smem, size = 0x4, offset = 0x4, fixed_abs, tag = 'smem constant byte address 0x4 - core index']
  #allocation1 [shape = 'u32[144,128]{1,0:T(1,128)}', space=vmem, size = 0x12000, scoped, tag = 'internal scratch']
  %s0 = inlined_call_operand.hbm [shape: bf16[2,64,128], index: 0, kind: input, shape index: {}]
  %s1 = inlined_call_operand.hbm [shape: bf16[128,128], index: 1, kind: input, shape index: {}]
  %s2 = inlined_call_operand.hbm [shape: bf16[2,64,128], index: 2, kind: input, shape index: {}]
  %s3 = inlined_call_operand.hbm [shape: bf16[128,128], index: 3, kind: input, shape index: {}]
  %s4 = inlined_call_operand.vmem [shape: f32[1,128], index: 4, kind: input, shape index: {}]
  %s5 = inlined_call_operand.hbm [shape: bf16[2,64,128], index: 5, kind: input, shape index: {}]
  %s6 = inlined_call_operand.hbm [shape: bf16[128,128], index: 6, kind: input, shape index: {}]
  %s7 = inlined_call_operand.vmem [shape: f32[1,128], index: 7, kind: input, shape index: {}]
  %s8 = inlined_call_operand.hbm [shape: f32[2,64,128], index: 8, kind: output, shape index: {}]
  %s9 = sld [smem:[#allocation0]]
  $region89: #{tpu_custom_call.1} parent=0
    _
  %s11 = ssub.s32 1, %s9
  %s12 = scalar_select 0, %s11, %s9
  $region1: #{tpu_custom_call.1} parent=0
    #allocation2 [shape = 'u8[32768]{0}', space=vmem, size = 0x8000, scoped, tag = 'input window, operand 0']
    #allocation3 [shape = 's32[2]{0}', space=sflag, size = 0x8, scoped, tag = 'scoped memory for tpu_custom_call.1']
    #allocation4 [shape = 's32[2]{0}', space=sflag, size = 0x8, scoped, tag = 'scoped memory for tpu_custom_call.1']
    #allocation5 [shape = 'u8[32768]{0}', space=vmem, size = 0x8000, scoped, tag = 'input window, operand 1, single buffered']
    #allocation6 [shape = 's32[1]{0}', space=sflag, size = 0x4, scoped, tag = 'scoped memory for tpu_custom_call.1']
    #allocation7 [shape = 'u8[32768]{0}', space=vmem, size = 0x8000, scoped, tag = 'input window, operand 2']
    #allocation8 [shape = 'u8[32768]{0}', space=vmem, size = 0x8000, scoped, tag = 'input window, operand 3, single buffered']
    #allocation9 [shape = 'u8[32768]{0}', space=vmem, size = 0x8000, scoped, tag = 'input window, operand 5']
    #allocation10 [shape = 's32[2]{0}', space=sflag, size = 0x8, scoped, tag = 'scoped memory for tpu_custom_call.1']
    #allocation11 [shape = 'u8[32768]{0}', space=vmem, size = 0x8000, scoped, tag = 'input window, operand 6, single buffered']
    #allocation12 [shape = 'u8[65536]{0}', space=vmem, size = 0x10000, scoped, tag = 'output window, operand 0']
    %13 = vsyncpa [#allocation3], 0
    %s14 = scalar_lea.sflag [#allocation3], 1
    %15 = vsyncpa %s14, 0
    %16 = vsyncpa [#allocation6], 0
    %17 = vsyncpa [#allocation10], 0
    %s18 = scalar_lea.sflag [#allocation10], 1
    %19 = vsyncpa %s18, 0
    %20 = vsyncpa [#allocation4], 0
    %s21 = scalar_lea.sflag [#allocation4], 1
    %22 = vsyncpa %s21, 0
    loop: start=0, step=1, limit=4
    $region2: #{tpu_custom_call.1} parent=1 // loop_pre_header
      _
    $region3: #{tpu_custom_call.1} parent=1 // loop_header
      %s24 = sphi 0, %s28
      %p25 = scmp.ge.s32.totalorder %s24, 4
      %s34 = sphi 0, %s36
      %s37 = sphi 0, %s34
      %s38 = sphi 0, %s37
      %s54 = sphi 0, %s38
      %s58 = sphi 0, %s58
      %s60 = sphi 0, %s58
      %s61 = sphi 0, %s60
      %s75 = sphi 0, %s61
      %s81 = sphi 0, %s83
      %s84 = sphi 0, %s81
      %s85 = sphi 0, %s84
      %s101 = sphi 0, %s85
      %s105 = sphi 0, %s105
      %s107 = sphi 0, %s105
      %s108 = sphi 0, %s107
      %s122 = sphi 0, %s108
      %s126 = sphi 0, %s126
      %s128 = sphi 0, %s126
      %s129 = sphi 0, %s128
      %s143 = sphi 0, %s129
      %s149 = sphi 0, %s151
      %s152 = sphi 0, %s149
      %s153 = sphi 0, %s152
      %s169 = sphi 0, %s153
      %s173 = sphi 0, %s173
      %s175 = sphi 0, %s173
      %s176 = sphi 0, %s175
      %s190 = sphi 0, %s176
      %s194 = sphi 0, %s194
      %s196 = sphi 0, %s194
      %s197 = sphi 0, %s196
      %s211 = sphi 0, %s197
      %s217 = sphi 0, %s219
      %s220 = sphi 0, %s217
      %s221 = sphi 0, %s220
      %s237 = sphi 0, %s221
    $region4: #{tpu_custom_call.1} parent=1 // loop_header_branch
      %27 = sbr.rel (%p25) target = $region8
    $region5: #{tpu_custom_call.1} parent=1 // loop_body
      %s29 = ssub.s32 %s24, 1
      %s30 = ssub.s32 %s24, 2
      %s31 = sadd.s32 %s24, 1
      %s32 = ssub.s32 %s24, %s31
      %p33 = scmp.eq.s32.totalorder %s32, 0
      %s35 = sadd.s32 %s34, 1
      %s36 = scalar_select %p33, %s34, %s35
      %p39 = pneg %p33
      %p40 = scmp.eq.s32.totalorder %s24, 1
      %p41 = por %p39, %p40
      %p42 = scmp.ne.s32.totalorder %s34, %s37
      %p43 = scmp.eq.s32.totalorder %s24, 0
      %p44 = por %p42, %p43
      %p45 = scmp.ne.s32.totalorder %s34, %s37
      %p46 = scmp.eq.s32.totalorder %s29, 1
      %p47 = por %p45, %p46
      %p48 = scmp.ne.s32.totalorder %s37, %s38
      %p49 = scmp.eq.s32.totalorder %s29, 0
      %p50 = por %p48, %p49
      %p51 = scmp.ne.s32.totalorder %s37, %s38
      %p52 = scmp.eq.s32.totalorder %s30, 1
      %p53 = por %p51, %p52
      %p55 = scmp.ne.s32.totalorder %s38, %s54
      %p56 = scmp.eq.s32.totalorder %s30, 0
      %p57 = por %p55, %p56
      %s59 = sadd.s32 %s58, 1
      %p62 = scmp.eq.s32.totalorder %s24, 1
      %p63 = scmp.ne.s32.totalorder %s58, %s60
      %p64 = scmp.eq.s32.totalorder %s24, 0
      %p65 = por %p63, %p64
      %p66 = scmp.ne.s32.totalorder %s58, %s60
      %p67 = scmp.eq.s32.totalorder %s29, 1
      %p68 = por %p66, %p67
      %p69 = scmp.ne.s32.totalorder %s60, %s61
      %p70 = scmp.eq.s32.totalorder %s29, 0
      %p71 = por %p69, %p70
      %p72 = scmp.ne.s32.totalorder %s60, %s61
      %p73 = scmp.eq.s32.totalorder %s30, 1
      %p74 = por %p72, %p73
      %p76 = scmp.ne.s32.totalorder %s61, %s75
      %p77 = scmp.eq.s32.totalorder %s30, 0
      %p78 = por %p76, %p77
      %s79 = ssub.s32 %s24, %s31
      %p80 = scmp.eq.s32.totalorder %s79, 0
      %s82 = sadd.s32 %s81, 1
      %s83 = scalar_select %p80, %s81, %s82
      %p86 = pneg %p80
      %p87 = scmp.eq.s32.totalorder %s24, 1
      %p88 = por %p86, %p87
      %p89 = scmp.ne.s32.totalorder %s81, %s84
      %p90 = scmp.eq.s32.totalorder %s24, 0
      %p91 = por %p89, %p90
      %p92 = scmp.ne.s32.totalorder %s81, %s84
      %p93 = scmp.eq.s32.totalorder %s29, 1
      %p94 = por %p92, %p93
      %p95 = scmp.ne.s32.totalorder %s84, %s85
      %p96 = scmp.eq.s32.totalorder %s29, 0
      %p97 = por %p95, %p96
      %p98 = scmp.ne.s32.totalorder %s84, %s85
      %p99 = scmp.eq.s32.totalorder %s30, 1
      %p100 = por %p98, %p99
      %p102 = scmp.ne.s32.totalorder %s85, %s101
      %p103 = scmp.eq.s32.totalorder %s30, 0
      %p104 = por %p102, %p103
      %s106 = sadd.s32 %s105, 1
      %p109 = scmp.eq.s32.totalorder %s24, 1
      %p110 = scmp.ne.s32.totalorder %s105, %s107
      %p111 = scmp.eq.s32.totalorder %s24, 0
      %p112 = por %p110, %p111
      %p113 = scmp.ne.s32.totalorder %s105, %s107
      %p114 = scmp.eq.s32.totalorder %s29, 1
      %p115 = por %p113, %p114
      %p116 = scmp.ne.s32.totalorder %s107, %s108
      %p117 = scmp.eq.s32.totalorder %s29, 0
      %p118 = por %p116, %p117
      %p119 = scmp.ne.s32.totalorder %s107, %s108
      %p120 = scmp.eq.s32.totalorder %s30, 1
      %p121 = por %p119, %p120
      %p123 = scmp.ne.s32.totalorder %s108, %s122
      %p124 = scmp.eq.s32.totalorder %s30, 0
      %p125 = por %p123, %p124
      %s127 = sadd.s32 %s126, 1
      %p130 = scmp.eq.s32.totalorder %s24, 1
      %p131 = scmp.ne.s32.totalorder %s126, %s128
      %p132 = scmp.eq.s32.totalorder %s24, 0
      %p133 = por %p131, %p132
      %p134 = scmp.ne.s32.totalorder %s126, %s128
      %p135 = scmp.eq.s32.totalorder %s29, 1
      %p136 = por %p134, %p135
      %p137 = scmp.ne.s32.totalorder %s128, %s129
      %p138 = scmp.eq.s32.totalorder %s29, 0
      %p139 = por %p137, %p138
      %p140 = scmp.ne.s32.totalorder %s128, %s129
      %p141 = scmp.eq.s32.totalorder %s30, 1
      %p142 = por %p140, %p141
      %p144 = scmp.ne.s32.totalorder %s129, %s143
      %p145 = scmp.eq.s32.totalorder %s30, 0
      %p146 = por %p144, %p145
      %s147 = ssub.s32 %s24, %s31
      %p148 = scmp.eq.s32.totalorder %s147, 0
      %s150 = sadd.s32 %s149, 1
      %s151 = scalar_select %p148, %s149, %s150
      %p154 = pneg %p148
      %p155 = scmp.eq.s32.totalorder %s24, 1
      %p156 = por %p154, %p155
      %p157 = scmp.ne.s32.totalorder %s149, %s152
      %p158 = scmp.eq.s32.totalorder %s24, 0
      %p159 = por %p157, %p158
      %p160 = scmp.ne.s32.totalorder %s149, %s152
      %p161 = scmp.eq.s32.totalorder %s29, 1
      %p162 = por %p160, %p161
      %p163 = scmp.ne.s32.totalorder %s152, %s153
      %p164 = scmp.eq.s32.totalorder %s29, 0
      %p165 = por %p163, %p164
      %p166 = scmp.ne.s32.totalorder %s152, %s153
      %p167 = scmp.eq.s32.totalorder %s30, 1
      %p168 = por %p166, %p167
      %p170 = scmp.ne.s32.totalorder %s153, %s169
      %p171 = scmp.eq.s32.totalorder %s30, 0
      %p172 = por %p170, %p171
      %s174 = sadd.s32 %s173, 1
      %p177 = scmp.eq.s32.totalorder %s24, 1
      %p178 = scmp.ne.s32.totalorder %s173, %s175
      %p179 = scmp.eq.s32.totalorder %s24, 0
      %p180 = por %p178, %p179
      %p181 = scmp.ne.s32.totalorder %s173, %s175
      %p182 = scmp.eq.s32.totalorder %s29, 1
      %p183 = por %p181, %p182
      %p184 = scmp.ne.s32.totalorder %s175, %s176
      %p185 = scmp.eq.s32.totalorder %s29, 0
      %p186 = por %p184, %p185
      %p187 = scmp.ne.s32.totalorder %s175, %s176
      %p188 = scmp.eq.s32.totalorder %s30, 1
      %p189 = por %p187, %p188
      %p191 = scmp.ne.s32.totalorder %s176, %s190
      %p192 = scmp.eq.s32.totalorder %s30, 0
      %p193 = por %p191, %p192
      %s195 = sadd.s32 %s194, 1
      %p198 = scmp.eq.s32.totalorder %s24, 1
      %p199 = scmp.ne.s32.totalorder %s194, %s196
      %p200 = scmp.eq.s32.totalorder %s24, 0
      %p201 = por %p199, %p200
      %p202 = scmp.ne.s32.totalorder %s194, %s196
      %p203 = scmp.eq.s32.totalorder %s29, 1
      %p204 = por %p202, %p203
      %p205 = scmp.ne.s32.totalorder %s196, %s197
      %p206 = scmp.eq.s32.totalorder %s29, 0
      %p207 = por %p205, %p206
      %p208 = scmp.ne.s32.totalorder %s196, %s197
      %p209 = scmp.eq.s32.totalorder %s30, 1
      %p210 = por %p208, %p209
      %p212 = scmp.ne.s32.totalorder %s197, %s211
      %p213 = scmp.eq.s32.totalorder %s30, 0
      %p214 = por %p212, %p213
      %s215 = ssub.s32 %s24, %s31
      %p216 = scmp.eq.s32.totalorder %s215, 0
      %s218 = sadd.s32 %s217, 1
      %s219 = scalar_select %p216, %s217, %s218
      %p222 = pneg %p216
      %p223 = scmp.eq.s32.totalorder %s24, 1
      %p224 = por %p222, %p223
      %p225 = scmp.ne.s32.totalorder %s217, %s220
      %p226 = scmp.eq.s32.totalorder %s24, 0
      %p227 = por %p225, %p226
      %p228 = scmp.ne.s32.totalorder %s217, %s220
      %p229 = scmp.eq.s32.totalorder %s29, 1
      %p230 = por %p228, %p229
      %p231 = scmp.ne.s32.totalorder %s220, %s221
      %p232 = scmp.eq.s32.totalorder %s29, 0
      %p233 = por %p231, %p232
      %p234 = scmp.ne.s32.totalorder %s220, %s221
      %p235 = scmp.eq.s32.totalorder %s30, 1
      %p236 = por %p234, %p235
      %p238 = scmp.ne.s32.totalorder %s221, %s237
      %p239 = scmp.eq.s32.totalorder %s30, 0
      %p240 = por %p238, %p239
      %p241 = scmp.le.s32.totalorder 1, %s24
      %p242 = scmp.lt.s32.totalorder %s24, 3
      %p243 = pnand %p241, %p242
      %p244 = pneg %p243
      // Predicated region
      $region9: #{tpu_custom_call.1} parent=5 // pred_check
        _
      $region10: #{tpu_custom_call.1} parent=5 // pred_check_branch
        %246 = sbr.rel (%p243) target = $region12
      $region11: #{tpu_custom_call.1} parent=5 // pred_region
        %s247 = ssub.s32 %s24, 1
        // Predicated region
        $region13: #{tpu_custom_call.1} parent=11 // pred_check
          %p248 = pneg %p71
        $region14: #{tpu_custom_call.1} parent=11 // pred_check_branch
          %250 = sbr.rel (%p248) target = $region16
        $region15: #{tpu_custom_call.1} parent=11 // pred_region
          %s252 = ssub.s32 1024, 1024
          %253 = vsyncadd [#allocation6], %s252
          %s254 = sshll.u32 [#allocation5], 4
          %s255 = int_to_ptr.vmem [resolvable:$true] %s254
          %260 = dma.hbm_to_vmem [thread:$0]  %s1, 1024, %s255, [#allocation6], 64, 64, 4
        $region16: #{tpu_custom_call.1} parent=11 // pred_fallthru
          _
        // Predicated region
        $region17: #{tpu_custom_call.1} parent=11 // pred_check
          %p261 = pneg %p118
        $region18: #{tpu_custom_call.1} parent=11 // pred_check_branch
          %263 = sbr.rel (%p261) target = $region20
        $region19: #{tpu_custom_call.1} parent=11 // pred_region
          %s265 = ssub.s32 1024, 1024
          %266 = vsyncadd [#allocation6], %s265
          %s267 = sshll.u32 [#allocation8], 4
          %s268 = int_to_ptr.vmem [resolvable:$true] %s267
          %273 = dma.hbm_to_vmem [thread:$0]  %s3, 1024, %s268, [#allocation6], 64, 64, 4
        $region20: #{tpu_custom_call.1} parent=11 // pred_fallthru
          _
        // Predicated region
        $region21: #{tpu_custom_call.1} parent=11 // pred_check
          %p274 = pneg %p139
        $region22: #{tpu_custom_call.1} parent=11 // pred_check_branch
          %276 = sbr.rel (%p274) target = $region24
        $region23: #{tpu_custom_call.1} parent=11 // pred_region
          _
        $region24: #{tpu_custom_call.1} parent=11 // pred_fallthru
          _
        // Predicated region
        $region25: #{tpu_custom_call.1} parent=11 // pred_check
          %p277 = pneg %p186
        $region26: #{tpu_custom_call.1} parent=11 // pred_check_branch
          %279 = sbr.rel (%p277) target = $region28
        $region27: #{tpu_custom_call.1} parent=11 // pred_region
          %s281 = ssub.s32 1024, 1024
          %282 = vsyncadd [#allocation10], %s281
          %s283 = sshll.u32 [#allocation11], 4
          %s284 = int_to_ptr.vmem [resolvable:$true] %s283
          %289 = dma.hbm_to_vmem [thread:$0]  %s6, 1024, %s284, [#allocation10], 64, 64, 4
        $region28: #{tpu_custom_call.1} parent=11 // pred_fallthru
          _
        // Predicated region
        $region29: #{tpu_custom_call.1} parent=11 // pred_check
          %p290 = pneg %p207
        $region30: #{tpu_custom_call.1} parent=11 // pred_check_branch
          %292 = sbr.rel (%p290) target = $region32
        $region31: #{tpu_custom_call.1} parent=11 // pred_region
          _
        $region32: #{tpu_custom_call.1} parent=11 // pred_fallthru
          _
      $region12: #{tpu_custom_call.1} parent=5 // pred_fallthru
        _
      %p293 = scmp.lt.s32.totalorder %s24, 2
      // Predicated region
      $region33: #{tpu_custom_call.1} parent=5 // pred_check
        %p294 = pneg %p293
      $region34: #{tpu_custom_call.1} parent=5 // pred_check_branch
        %296 = sbr.rel (%p294) target = $region36
      $region35: #{tpu_custom_call.1} parent=5 // pred_region
        // Predicated region
        $region37: #{tpu_custom_call.1} parent=35 // pred_check
          %p297 = pneg %p44
        $region38: #{tpu_custom_call.1} parent=35 // pred_check_branch
          %299 = sbr.rel (%p297) target = $region40
        $region39: #{tpu_custom_call.1} parent=35 // pred_region
          %s300 = sand.u32 %s24, 1
          %s301 = scalar_lea.sflag [#allocation3], %s300
          %s302 = sand.u32 %s34, 1
          %s303 = smul.addr %s302, 32
          %s304 = scalar_lea.vmem [#allocation2], %s303
          %s306 = ssub.s32 512, 512
          %307 = vsyncadd %s301, %s306
          %s308 = smul.addr %s24, 8
          %s309 = smul.addr %s308, 64
          %s310 = scalar_lea.hbm %s0, %s309
          %s311 = sshll.u32 %s304, 4
          %s312 = int_to_ptr.vmem [resolvable:$true] %s311
          %317 = dma.hbm_to_vmem [thread:$0]  %s310, 512, %s312, %s301, 64, 64, 4
        $region40: #{tpu_custom_call.1} parent=35 // pred_fallthru
          _
        // Predicated region
        $region41: #{tpu_custom_call.1} parent=35 // pred_check
          %p318 = pneg %p91
        $region42: #{tpu_custom_call.1} parent=35 // pred_check_branch
          %320 = sbr.rel (%p318) target = $region44
        $region43: #{tpu_custom_call.1} parent=35 // pred_region
          %s321 = sand.u32 %s24, 1
          %s322 = scalar_lea.sflag [#allocation3], %s321
          %s323 = sand.u32 %s81, 1
          %s324 = smul.addr %s323, 32
          %s325 = scalar_lea.vmem [#allocation7], %s324
          %s327 = ssub.s32 512, 512
          %328 = vsyncadd %s322, %s327
          %s329 = smul.addr %s24, 8
          %s330 = smul.addr %s329, 64
          %s331 = scalar_lea.hbm %s2, %s330
          %s332 = sshll.u32 %s325, 4
          %s333 = int_to_ptr.vmem [resolvable:$true] %s332
          %338 = dma.hbm_to_vmem [thread:$0]  %s331, 512, %s333, %s322, 64, 64, 4
        $region44: #{tpu_custom_call.1} parent=35 // pred_fallthru
          _
        // Predicated region
        $region45: #{tpu_custom_call.1} parent=35 // pred_check
          %p339 = pneg %p159
        $region46: #{tpu_custom_call.1} parent=35 // pred_check_branch
          %341 = sbr.rel (%p339) target = $region48
        $region47: #{tpu_custom_call.1} parent=35 // pred_region
          %s342 = sand.u32 %s24, 1
          %s343 = scalar_lea.sflag [#allocation10], %s342
          %s344 = sand.u32 %s149, 1
          %s345 = smul.addr %s344, 32
          %s346 = scalar_lea.vmem [#allocation9], %s345
          %s348 = ssub.s32 512, 512
          %349 = vsyncadd %s343, %s348
          %s350 = smul.addr %s24, 8
          %s351 = smul.addr %s350, 64
          %s352 = scalar_lea.hbm %s5, %s351
          %s353 = sshll.u32 %s346, 4
          %s354 = int_to_ptr.vmem [resolvable:$true] %s353
          %359 = dma.hbm_to_vmem [thread:$0]  %s352, 512, %s354, %s343, 64, 64, 4
        $region48: #{tpu_custom_call.1} parent=35 // pred_fallthru
          _
      $region36: #{tpu_custom_call.1} parent=5 // pred_fallthru
        _
      %p360 = scmp.le.s32.totalorder 1, %s24
      %p361 = scmp.lt.s32.totalorder %s24, 3
      %p362 = pnand %p360, %p361
      %p363 = pneg %p362
      // Predicated region
      $region49: #{tpu_custom_call.1} parent=5 // pred_check
        _
      $region50: #{tpu_custom_call.1} parent=5 // pred_check_branch
        %365 = sbr.rel (%p362) target = $region52
      $region51: #{tpu_custom_call.1} parent=5 // pred_region
        %s366 = ssub.s32 %s24, 1
        %s367 = sand.u32 %s29, 1
        %s368 = scalar_lea.sflag [#allocation3], %s367
        %s369 = sand.u32 %s37, 1
        %s370 = smul.addr %s369, 32
        %s371 = scalar_lea.vmem [#allocation2], %s370
        // Predicated region
        $region53: #{tpu_custom_call.1} parent=51 // pred_check
          %p372 = pneg %p50
        $region54: #{tpu_custom_call.1} parent=51 // pred_check_branch
          %374 = sbr.rel (%p372) target = $region56
        $region55: #{tpu_custom_call.1} parent=51 // pred_region
          %375 = dma.done %s368, 512
        $region56: #{tpu_custom_call.1} parent=51 // pred_fallthru
          _
        // Predicated region
        $region57: #{tpu_custom_call.1} parent=51 // pred_check
          %p376 = pneg %p71
        $region58: #{tpu_custom_call.1} parent=51 // pred_check_branch
          %378 = sbr.rel (%p376) target = $region60
        $region59: #{tpu_custom_call.1} parent=51 // pred_region
          %379 = dma.done [#allocation6], 1024
        $region60: #{tpu_custom_call.1} parent=51 // pred_fallthru
          _
        %s380 = sand.u32 %s29, 1
        %s381 = scalar_lea.sflag [#allocation3], %s380
        %s382 = sand.u32 %s84, 1
        %s383 = smul.addr %s382, 32
        %s384 = scalar_lea.vmem [#allocation7], %s383
        // Predicated region
        $region61: #{tpu_custom_call.1} parent=51 // pred_check
          %p385 = pneg %p97
        $region62: #{tpu_custom_call.1} parent=51 // pred_check_branch
          %387 = sbr.rel (%p385) target = $region64
        $region63: #{tpu_custom_call.1} parent=51 // pred_region
          %388 = dma.done %s381, 512
        $region64: #{tpu_custom_call.1} parent=51 // pred_fallthru
          _
        // Predicated region
        $region65: #{tpu_custom_call.1} parent=51 // pred_check
          %p389 = pneg %p118
        $region66: #{tpu_custom_call.1} parent=51 // pred_check_branch
          %391 = sbr.rel (%p389) target = $region68
        $region67: #{tpu_custom_call.1} parent=51 // pred_region
          %392 = dma.done [#allocation6], 1024
        $region68: #{tpu_custom_call.1} parent=51 // pred_fallthru
          _
        %s393 = sand.u32 %s29, 1
        %s394 = scalar_lea.sflag [#allocation10], %s393
        %s395 = sand.u32 %s152, 1
        %s396 = smul.addr %s395, 32
        %s397 = scalar_lea.vmem [#allocation9], %s396
        // Predicated region
        $region69: #{tpu_custom_call.1} parent=51 // pred_check
          %p398 = pneg %p165
        $region70: #{tpu_custom_call.1} parent=51 // pred_check_branch
          %400 = sbr.rel (%p398) target = $region72
        $region71: #{tpu_custom_call.1} parent=51 // pred_region
          %401 = dma.done %s394, 512
        $region72: #{tpu_custom_call.1} parent=51 // pred_fallthru
          _
        // Predicated region
        $region73: #{tpu_custom_call.1} parent=51 // pred_check
          %p402 = pneg %p186
        $region74: #{tpu_custom_call.1} parent=51 // pred_check_branch
          %404 = sbr.rel (%p402) target = $region76
        $region75: #{tpu_custom_call.1} parent=51 // pred_region
          %405 = dma.done [#allocation10], 1024
        $region76: #{tpu_custom_call.1} parent=51 // pred_fallthru
          _
        %s406 = sand.u32 %s29, 1
        %s407 = scalar_lea.sflag [#allocation3], %s406
        %s408 = sand.u32 %s37, 1
        %s409 = smul.addr %s408, 32
        %s410 = scalar_lea.vmem [#allocation2], %s409
        %p411 = pneg %p50
        %p412 = pneg %p47
        %p413 = pneg %p71
        %p414 = pneg %p68
        %s415 = sand.u32 %s29, 1
        %s416 = scalar_lea.sflag [#allocation3], %s415
        %s417 = sand.u32 %s84, 1
        %s418 = smul.addr %s417, 32
        %s419 = scalar_lea.vmem [#allocation7], %s418
        %p420 = pneg %p97
        %p421 = pneg %p94
        %p422 = pneg %p118
        %p423 = pneg %p115
        %p424 = pneg %p139
        %p425 = pneg %p136
        %s426 = sand.u32 %s29, 1
        %s427 = scalar_lea.sflag [#allocation10], %s426
        %s428 = sand.u32 %s152, 1
        %s429 = smul.addr %s428, 32
        %s430 = scalar_lea.vmem [#allocation9], %s429
        %p431 = pneg %p165
        %p432 = pneg %p162
        %p433 = pneg %p186
        %p434 = pneg %p183
        %p435 = pneg %p207
        %p436 = pneg %p204
        %p437 = pneg %p233
        %p438 = pneg %p230
        %s439 = sand.u32 %s220, 1
        %s440 = scalar_lea.sflag [#allocation4], %s439
        %s441 = sand.u32 %s220, 1
        %s442 = smul.addr %s441, 64
        %s443 = scalar_lea.vmem [#allocation12], %s442
        %v445 = vld [vmem:[%s371] sm:$0xf]
        %v446 = vld [vmem:[%s371 + $0x4] sm:$0xf]
        %v447 = vld [vmem:[%s371 + $0x8] sm:$0xf]
        %v448 = vld [vmem:[%s371 + $0xc] sm:$0xf]
        %v449 = vld [vmem:[%s371 + $0x10] sm:$0xf]
        %v450 = vld [vmem:[%s371 + $0x14] sm:$0xf]
        %v451 = vld [vmem:[%s371 + $0x18] sm:$0xf]
        %v452 = vld [vmem:[%s371 + $0x1c] sm:$0xf]
        %v453 = vld [vmem:[#allocation5] sm:$0xf]
        %v454 = vld [vmem:[#allocation5 + $0x4] sm:$0xf]
        %v455 = vld [vmem:[#allocation5 + $0x8] sm:$0xf]
        %v456 = vld [vmem:[#allocation5 + $0xc] sm:$0xf]
        %v457 = vld [vmem:[#allocation5 + $0x10] sm:$0xf]
        %v458 = vld [vmem:[#allocation5 + $0x14] sm:$0xf]
        %v459 = vld [vmem:[#allocation5 + $0x18] sm:$0xf]
        %v460 = vld [vmem:[#allocation5 + $0x1c] sm:$0xf]
        %v461 = vld [vmem:[#allocation5 + $0x20] sm:$0xf]
        %v462 = vld [vmem:[#allocation5 + $0x24] sm:$0xf]
        %v463 = vld [vmem:[#allocation5 + $0x28] sm:$0xf]
        %v464 = vld [vmem:[#allocation5 + $0x2c] sm:$0xf]
        %v465 = vld [vmem:[#allocation5 + $0x30] sm:$0xf]
        %v466 = vld [vmem:[#allocation5 + $0x34] sm:$0xf]
        %v467 = vld [vmem:[#allocation5 + $0x38] sm:$0xf]
        %v468 = vld [vmem:[#allocation5 + $0x3c] sm:$0xf]
        %v477 = vunpack.c.l.b16 %v445
        %v478 = vunpack.c.l.b16 %v446
        %v479 = vunpack.c.l.b16 %v447
        %v480 = vunpack.c.l.b16 %v448
        %v481 = vunpack.c.l.b16 %v449
        %v482 = vunpack.c.l.b16 %v450
        %v483 = vunpack.c.l.b16 %v451
        %v484 = vunpack.c.l.b16 %v452
        %v485 = vpack.c.b16 %v478, %v477
        %v486 = vpack.c.b16 %v480, %v479
        %v487 = vpack.c.b16 %v482, %v481
        %v488 = vpack.c.b16 %v484, %v483
        %v509 = vunpack.c.l.b16 %v453
        %v510 = vunpack.c.l.b16 %v454
        %v511 = vunpack.c.l.b16 %v455
        %v512 = vunpack.c.l.b16 %v456
        %v513 = vunpack.c.l.b16 %v457
        %v514 = vunpack.c.l.b16 %v458
        %v515 = vunpack.c.l.b16 %v459
        %v516 = vunpack.c.l.b16 %v460
        %v517 = vunpack.c.l.b16 %v461
        %v518 = vunpack.c.l.b16 %v462
        %v519 = vunpack.c.l.b16 %v463
        %v520 = vunpack.c.l.b16 %v464
        %v521 = vunpack.c.l.b16 %v465
        %v522 = vunpack.c.l.b16 %v466
        %v523 = vunpack.c.l.b16 %v467
        %v524 = vunpack.c.l.b16 %v468
        %v525 = vpack.c.b16 %v510, %v509
        %v526 = vpack.c.b16 %v512, %v511
        %v527 = vpack.c.b16 %v514, %v513
        %v528 = vpack.c.b16 %v516, %v515
        %v529 = vpack.c.b16 %v518, %v517
        %v530 = vpack.c.b16 %v520, %v519
        %v531 = vpack.c.b16 %v522, %v521
        %v532 = vpack.c.b16 %v524, %v523
        %541 = vmatprep.subr.bf16.mxu0 0
        %542 = vmatpush1.bf16.msra.mxu0 %v525
        %543 = vmatprep.subr.bf16.mxu0 0
        %544 = vmatpush1.bf16.msra.mxu0 %v526
        %545 = vmatprep.subr.bf16.mxu0 0
        %546 = vmatpush1.bf16.msra.mxu0 %v527
        %547 = vmatprep.subr.bf16.mxu0 0
        %548 = vmatpush1.bf16.msra.mxu0 %v528
        %549 = vmatprep.subr.bf16.mxu0 0
        %550 = vmatpush1.bf16.msra.mxu0 %v529
        %551 = vmatprep.subr.bf16.mxu0 0
        %552 = vmatpush1.bf16.msra.mxu0 %v530
        %553 = vmatprep.subr.bf16.mxu0 0
        %554 = vmatpush1.bf16.msra.mxu0 %v531
        %555 = vmatprep.subr.bf16.mxu0 0
        %556 = vmatpush1.bf16.msra.mxu0 %v532
        %557 = vmatprep.subr.bf16.mxu0 0
        %558 = vmatpush1.bf16.msra.mxu0 0
        %559 = vmatprep.subr.bf16.mxu0 0
        %560 = vmatpush1.bf16.msra.mxu0 0
        %561 = vmatprep.subr.bf16.mxu0 0
        %562 = vmatpush1.bf16.msra.mxu0 0
        %563 = vmatprep.subr.bf16.mxu0 0
        %564 = vmatpush1.bf16.msra.mxu0 0
        %565 = vmatprep.subr.bf16.mxu0 0
        %566 = vmatpush1.bf16.msra.mxu0 0
        %567 = vmatprep.subr.bf16.mxu0 0
        %568 = vmatpush1.bf16.msra.mxu0 0
        %569 = vmatprep.subr.bf16.mxu0 0
        %570 = vmatpush1.bf16.msra.mxu0 0
        %571 = vmatprep.subr.bf16.mxu0 0
        %572 = vmatpush1.bf16.msra.mxu0 0
        %573 = vmatprep.mubr.bf16.mxu0 0
        %574 = vmatmul.mubr.bf16.gmra.mrb[0].mxu0 %v485
        %v575 = vpop.f32.mrb[0].mxu0
        %v576 = vadd.f32 0.0, %v575
        %v577 = vpop.f32.mrb[0].mxu0
        %v578 = vpop.f32.mrb[0].mxu0
        %v579 = vadd.f32 0.0, %v578
        %v580 = vpop.f32.mrb[0].mxu0
        %581 = vmatprep.mubr.bf16.mxu0 0
        %582 = vmatmul.mubr.bf16.gmra.mrb[0].mxu0 %v486
        %v583 = vpop.f32.mrb[0].mxu0
        %v584 = vadd.f32 0.0, %v583
        %v585 = vpop.f32.mrb[0].mxu0
        %v586 = vpop.f32.mrb[0].mxu0
        %v587 = vadd.f32 0.0, %v586
        %v588 = vpop.f32.mrb[0].mxu0
        %589 = vmatprep.mubr.bf16.mxu0 0
        %590 = vmatmul.mubr.bf16.gmra.mrb[0].mxu0 %v487
        %v591 = vpop.f32.mrb[0].mxu0
        %v592 = vadd.f32 0.0, %v591
        %v593 = vpop.f32.mrb[0].mxu0
        %v594 = vpop.f32.mrb[0].mxu0
        %v595 = vadd.f32 0.0, %v594
        %v596 = vpop.f32.mrb[0].mxu0
        %597 = vmatprep.mubr.bf16.mxu0 0
        %598 = vmatmul.mubr.bf16.gmra.mrb[0].mxu0 %v488
        %v599 = vpop.f32.mrb[0].mxu0
        %v600 = vadd.f32 0.0, %v599
        %v601 = vpop.f32.mrb[0].mxu0
        %v602 = vpop.f32.mrb[0].mxu0
        %v603 = vadd.f32 0.0, %v602
        %v604 = vpop.f32.mrb[0].mxu0
        %605 = vdwg.mxu0
        %v606 = vadd.f32 %v576, %v579
        %v607 = vadd.f32 %v606, %v584
        %v608 = vadd.f32 %v607, %v587
        %v609 = vadd.f32 %v608, %v592
        %v610 = vadd.f32 %v609, %v595
        %v611 = vadd.f32 %v610, %v600
        %v612 = vadd.f32 %v611, %v603
        %v613 = vrot.slane %v612, 4
        %v614 = vadd.f32 %v612, %v613
        %v615 = vrot.slane %v614, 2
        %v616 = vadd.f32 %v614, %v615
        %v617 = vrot.slane %v616, 1
        %v618 = vadd.f32 %v616, %v617
        %v619 = vrcp.pop 64.0
        %v620 = vmul.f32 %v618, %v619
        %v621 = vsub.f32 %v576, %v620
        %v622 = vsub.f32 %v579, %v620
        %v623 = vsub.f32 %v584, %v620
        %v624 = vsub.f32 %v587, %v620
        %v625 = vsub.f32 %v592, %v620
        %v626 = vsub.f32 %v595, %v620
        %v627 = vsub.f32 %v600, %v620
        %v628 = vsub.f32 %v603, %v620
        %v629 = vmul.f32 %v621, %v621
        %v630 = vmul.f32 %v622, %v622
        %v631 = vmul.f32 %v623, %v623
        %v632 = vmul.f32 %v624, %v624
        %v633 = vmul.f32 %v625, %v625
        %v634 = vmul.f32 %v626, %v626
        %v635 = vmul.f32 %v627, %v627
        %v636 = vmul.f32 %v628, %v628
        %v637 = vadd.f32 %v629, %v630
        %v638 = vadd.f32 %v637, %v631
        %v639 = vadd.f32 %v638, %v632
        %v640 = vadd.f32 %v639, %v633
        %v641 = vadd.f32 %v640, %v634
        %v642 = vadd.f32 %v641, %v635
        %v643 = vadd.f32 %v642, %v636
        %v644 = vrot.slane %v643, 4
        %v645 = vadd.f32 %v643, %v644
        %v646 = vrot.slane %v645, 2
        %v647 = vadd.f32 %v645, %v646
        %v648 = vrot.slane %v647, 1
        %v649 = vadd.f32 %v647, %v648
        %v650 = vmul.f32 %v649, %v619
        %v651 = vadd.f32 %v650, 0.8
        %v652 = vrsqrt.pop %v651
        %v653 = vmul.f32 %v621, %v652
        %v654 = vmul.f32 %v622, %v652
        %v655 = vmul.f32 %v623, %v652
        %v656 = vmul.f32 %v624, %v652
        %v657 = vmul.f32 %v625, %v652
        %v658 = vmul.f32 %v626, %v652
        %v659 = vmul.f32 %v627, %v652
        %v660 = vmul.f32 %v628, %v652
        %vm661 = vcmp.ge.f32.partialorder %v653, 0.0
        %vm662 = vcmp.ge.f32.partialorder %v654, 0.0
        %vm663 = vcmp.ge.f32.partialorder %v655, 0.0
        %vm664 = vcmp.ge.f32.partialorder %v656, 0.0
        %vm665 = vcmp.ge.f32.partialorder %v657, 0.0
        %vm666 = vcmp.ge.f32.partialorder %v658, 0.0
        %vm667 = vcmp.ge.f32.partialorder %v659, 0.0
        %vm668 = vcmp.ge.f32.partialorder %v660, 0.0
        %v669 = vmul.f32 %v653, 0.2
        %v670 = vmul.f32 %v654, 0.2
        %v671 = vmul.f32 %v655, 0.2
        %v672 = vmul.f32 %v656, 0.2
        %v673 = vmul.f32 %v657, 0.2
        %v674 = vmul.f32 %v658, 0.2
        %v675 = vmul.f32 %v659, 0.2
        %v676 = vmul.f32 %v660, 0.2
        %v677 = vsel %vm661, %v653, %v669
        %v678 = vsel %vm662, %v654, %v670
        %v679 = vsel %vm663, %v655, %v671
        %v680 = vsel %vm664, %v656, %v672
        %v681 = vsel %vm665, %v657, %v673
        %v682 = vsel %vm666, %v658, %v674
        %v683 = vsel %vm667, %v659, %v675
        %v684 = vsel %vm668, %v660, %v676
        %v685 = vld [vmem:[%s384] sm:$0xf]
        %v686 = vld [vmem:[%s384 + $0x4] sm:$0xf]
        %v687 = vld [vmem:[%s384 + $0x8] sm:$0xf]
        %v688 = vld [vmem:[%s384 + $0xc] sm:$0xf]
        %v689 = vld [vmem:[%s384 + $0x10] sm:$0xf]
        %v690 = vld [vmem:[%s384 + $0x14] sm:$0xf]
        %v691 = vld [vmem:[%s384 + $0x18] sm:$0xf]
        %v692 = vld [vmem:[%s384 + $0x1c] sm:$0xf]
        %v693 = vld [vmem:[#allocation8] sm:$0xf]
        %v694 = vld [vmem:[#allocation8 + $0x4] sm:$0xf]
        %v695 = vld [vmem:[#allocation8 + $0x8] sm:$0xf]
        %v696 = vld [vmem:[#allocation8 + $0xc] sm:$0xf]
        %v697 = vld [vmem:[#allocation8 + $0x10] sm:$0xf]
        %v698 = vld [vmem:[#allocation8 + $0x14] sm:$0xf]
        %v699 = vld [vmem:[#allocation8 + $0x18] sm:$0xf]
        %v700 = vld [vmem:[#allocation8 + $0x1c] sm:$0xf]
        %v701 = vld [vmem:[#allocation8 + $0x20] sm:$0xf]
        %v702 = vld [vmem:[#allocation8 + $0x24] sm:$0xf]
        %v703 = vld [vmem:[#allocation8 + $0x28] sm:$0xf]
        %v704 = vld [vmem:[#allocation8 + $0x2c] sm:$0xf]
        %v705 = vld [vmem:[#allocation8 + $0x30] sm:$0xf]
        %v706 = vld [vmem:[#allocation8 + $0x34] sm:$0xf]
        %v707 = vld [vmem:[#allocation8 + $0x38] sm:$0xf]
        %v708 = vld [vmem:[#allocation8 + $0x3c] sm:$0xf]
        %v709 = vld [vmem:[%s4] sm:$0x1]
        %v711 = vlaneseq
        %v712 = vshrl.u32 %v711, 7
        %v713 = vsub.s32 0, %v712
        %v714 = vrot.slane %v709, %v713
        %v724 = vunpack.c.l.b16 %v685
        %v725 = vunpack.c.l.b16 %v686
        %v726 = vunpack.c.l.b16 %v687
        %v727 = vunpack.c.l.b16 %v688
        %v728 = vunpack.c.l.b16 %v689
        %v729 = vunpack.c.l.b16 %v690
        %v730 = vunpack.c.l.b16 %v691
        %v731 = vunpack.c.l.b16 %v692
        %v732 = vpack.c.b16 %v725, %v724
        %v733 = vpack.c.b16 %v727, %v726
        %v734 = vpack.c.b16 %v729, %v728
        %v735 = vpack.c.b16 %v731, %v730
        %v756 = vunpack.c.l.b16 %v693
        %v757 = vunpack.c.l.b16 %v694
        %v758 = vunpack.c.l.b16 %v695
        %v759 = vunpack.c.l.b16 %v696
        %v760 = vunpack.c.l.b16 %v697
        %v761 = vunpack.c.l.b16 %v698
        %v762 = vunpack.c.l.b16 %v699
        %v763 = vunpack.c.l.b16 %v700
        %v764 = vunpack.c.l.b16 %v701
        %v765 = vunpack.c.l.b16 %v702
        %v766 = vunpack.c.l.b16 %v703
        %v767 = vunpack.c.l.b16 %v704
        %v768 = vunpack.c.l.b16 %v705
        %v769 = vunpack.c.l.b16 %v706
        %v770 = vunpack.c.l.b16 %v707
        %v771 = vunpack.c.l.b16 %v708
        %v772 = vpack.c.b16 %v757, %v756
        %v773 = vpack.c.b16 %v759, %v758
        %v774 = vpack.c.b16 %v761, %v760
        %v775 = vpack.c.b16 %v763, %v762
        %v776 = vpack.c.b16 %v765, %v764
        %v777 = vpack.c.b16 %v767, %v766
        %v778 = vpack.c.b16 %v769, %v768
        %v779 = vpack.c.b16 %v771, %v770
        %788 = vmatprep.subr.bf16.mxu0 0
        %789 = vmatpush1.bf16.msra.mxu0 %v772
        %790 = vmatprep.subr.bf16.mxu0 0
        %791 = vmatpush1.bf16.msra.mxu0 %v773
        %792 = vmatprep.subr.bf16.mxu0 0
        %793 = vmatpush1.bf16.msra.mxu0 %v774
        %794 = vmatprep.subr.bf16.mxu0 0
        %795 = vmatpush1.bf16.msra.mxu0 %v775
        %796 = vmatprep.subr.bf16.mxu0 0
        %797 = vmatpush1.bf16.msra.mxu0 %v776
        %798 = vmatprep.subr.bf16.mxu0 0
        %799 = vmatpush1.bf16.msra.mxu0 %v777
        %800 = vmatprep.subr.bf16.mxu0 0
        %801 = vmatpush1.bf16.msra.mxu0 %v778
        %802 = vmatprep.subr.bf16.mxu0 0
        %803 = vmatpush1.bf16.msra.mxu0 %v779
        %804 = vmatprep.subr.bf16.mxu0 0
        %805 = vmatpush1.bf16.msra.mxu0 0
        %806 = vmatprep.subr.bf16.mxu0 0
        %807 = vmatpush1.bf16.msra.mxu0 0
        %808 = vmatprep.subr.bf16.mxu0 0
        %809 = vmatpush1.bf16.msra.mxu0 0
        %810 = vmatprep.subr.bf16.mxu0 0
        %811 = vmatpush1.bf16.msra.mxu0 0
        %812 = vmatprep.subr.bf16.mxu0 0
        %813 = vmatpush1.bf16.msra.mxu0 0
        %814 = vmatprep.subr.bf16.mxu0 0
        %815 = vmatpush1.bf16.msra.mxu0 0
        %816 = vmatprep.subr.bf16.mxu0 0
        %817 = vmatpush1.bf16.msra.mxu0 0
        %818 = vmatprep.subr.bf16.mxu0 0
        %819 = vmatpush1.bf16.msra.mxu0 0
        %820 = vmatprep.mubr.bf16.mxu0 0
        %821 = vmatmul.mubr.bf16.gmra.mrb[0].mxu0 %v732
        %v822 = vpop.f32.mrb[0].mxu0
        %v823 = vadd.f32 %v714, %v822
        %v824 = vpop.f32.mrb[0].mxu0
        %v825 = vpop.f32.mrb[0].mxu0
        %v826 = vadd.f32 %v714, %v825
        %v827 = vpop.f32.mrb[0].mxu0
        %828 = vmatprep.mubr.bf16.mxu0 0
        %829 = vmatmul.mubr.bf16.gmra.mrb[0].mxu0 %v733
        %v830 = vpop.f32.mrb[0].mxu0
        %v831 = vadd.f32 %v714, %v830
        %v832 = vpop.f32.mrb[0].mxu0
        %v833 = vpop.f32.mrb[0].mxu0
        %v834 = vadd.f32 %v714, %v833
        %v835 = vpop.f32.mrb[0].mxu0
        %836 = vmatprep.mubr.bf16.mxu0 0
        %837 = vmatmul.mubr.bf16.gmra.mrb[0].mxu0 %v734
        %v838 = vpop.f32.mrb[0].mxu0
        %v839 = vadd.f32 %v714, %v838
        %v840 = vpop.f32.mrb[0].mxu0
        %v841 = vpop.f32.mrb[0].mxu0
        %v842 = vadd.f32 %v714, %v841
        %v843 = vpop.f32.mrb[0].mxu0
        %844 = vmatprep.mubr.bf16.mxu0 0
        %845 = vmatmul.mubr.bf16.gmra.mrb[0].mxu0 %v735
        %v846 = vpop.f32.mrb[0].mxu0
        %v847 = vadd.f32 %v714, %v846
        %v848 = vpop.f32.mrb[0].mxu0
        %v849 = vpop.f32.mrb[0].mxu0
        %v850 = vadd.f32 %v714, %v849
        %v851 = vpop.f32.mrb[0].mxu0
        %852 = vdwg.mxu0
        %v853 = vsub.f32 0.0, %v823
        %v854 = vsub.f32 0.0, %v826
        %v855 = vsub.f32 0.0, %v831
        %v856 = vsub.f32 0.0, %v834
        %v857 = vsub.f32 0.0, %v839
        %v858 = vsub.f32 0.0, %v842
        %v859 = vsub.f32 0.0, %v847
        %v860 = vsub.f32 0.0, %v850
        %v861 = vmul.f32 %v853, 1.442695
        %v862 = vpow.pop %v861
        %v863 = vmul.f32 %v854, 1.442695
        %v864 = vpow.pop %v863
        %v865 = vmul.f32 %v855, 1.442695
        %v866 = vpow.pop %v865
        %v867 = vmul.f32 %v856, 1.442695
        %v868 = vpow.pop %v867
        %v869 = vmul.f32 %v857, 1.442695
        %v870 = vpow.pop %v869
        %v871 = vmul.f32 %v858, 1.442695
        %v872 = vpow.pop %v871
        %v873 = vmul.f32 %v859, 1.442695
        %v874 = vpow.pop %v873
        %v875 = vmul.f32 %v860, 1.442695
        %v876 = vpow.pop %v875
        %v877 = vadd.f32 %v862, 1.0
        %v878 = vadd.f32 %v864, 1.0
        %v879 = vadd.f32 %v866, 1.0
        %v880 = vadd.f32 %v868, 1.0
        %v881 = vadd.f32 %v870, 1.0
        %v882 = vadd.f32 %v872, 1.0
        %v883 = vadd.f32 %v874, 1.0
        %v884 = vadd.f32 %v876, 1.0
        %v885 = vrcp.pop %v877
        %v886 = vmul.f32 1.0, %v885
        %v887 = vrcp.pop %v878
        %v888 = vmul.f32 1.0, %v887
        %v889 = vrcp.pop %v879
        %v890 = vmul.f32 1.0, %v889
        %v891 = vrcp.pop %v880
        %v892 = vmul.f32 1.0, %v891
        %v893 = vrcp.pop %v881
        %v894 = vmul.f32 1.0, %v893
        %v895 = vrcp.pop %v882
        %v896 = vmul.f32 1.0, %v895
        %v897 = vrcp.pop %v883
        %v898 = vmul.f32 1.0, %v897
        %v899 = vrcp.pop %v884
        %v900 = vmul.f32 1.0, %v899
        %v901 = vld [vmem:[%s397] sm:$0xf]
        %v902 = vld [vmem:[%s397 + $0x4] sm:$0xf]
        %v903 = vld [vmem:[%s397 + $0x8] sm:$0xf]
        %v904 = vld [vmem:[%s397 + $0xc] sm:$0xf]
        %v905 = vld [vmem:[%s397 + $0x10] sm:$0xf]
        %v906 = vld [vmem:[%s397 + $0x14] sm:$0xf]
        %v907 = vld [vmem:[%s397 + $0x18] sm:$0xf]
        %v908 = vld [vmem:[%s397 + $0x1c] sm:$0xf]
        %v909 = vld [vmem:[#allocation11] sm:$0xf]
        %v910 = vld [vmem:[#allocation11 + $0x4] sm:$0xf]
        %v911 = vld [vmem:[#allocation11 + $0x8] sm:$0xf]
        %v912 = vld [vmem:[#allocation11 + $0xc] sm:$0xf]
        %v913 = vld [vmem:[#allocation11 + $0x10] sm:$0xf]
        %v914 = vld [vmem:[#allocation11 + $0x14] sm:$0xf]
        %v915 = vld [vmem:[#allocation11 + $0x18] sm:$0xf]
        %v916 = vld [vmem:[#allocation11 + $0x1c] sm:$0xf]
        %v917 = vld [vmem:[#allocation11 + $0x20] sm:$0xf]
        %v918 = vld [vmem:[#allocation11 + $0x24] sm:$0xf]
        %v919 = vld [vmem:[#allocation11 + $0x28] sm:$0xf]
        %v920 = vld [vmem:[#allocation11 + $0x2c] sm:$0xf]
        %v921 = vld [vmem:[#allocation11 + $0x30] sm:$0xf]
        %v922 = vld [vmem:[#allocation11 + $0x34] sm:$0xf]
        %v923 = vld [vmem:[#allocation11 + $0x38] sm:$0xf]
        %v924 = vld [vmem:[#allocation11 + $0x3c] sm:$0xf]
        %v925 = vld [vmem:[%s7] sm:$0x1]
        %v927 = vlaneseq
        %v928 = vshrl.u32 %v927, 7
        %v929 = vsub.s32 0, %v928
        %v930 = vrot.slane %v925, %v929
        %v940 = vunpack.c.l.b16 %v901
        %v941 = vunpack.c.l.b16 %v902
        %v942 = vunpack.c.l.b16 %v903
        %v943 = vunpack.c.l.b16 %v904
        %v944 = vunpack.c.l.b16 %v905
        %v945 = vunpack.c.l.b16 %v906
        %v946 = vunpack.c.l.b16 %v907
        %v947 = vunpack.c.l.b16 %v908
        %v948 = vpack.c.b16 %v941, %v940
        %v949 = vpack.c.b16 %v943, %v942
        %v950 = vpack.c.b16 %v945, %v944
        %v951 = vpack.c.b16 %v947, %v946
        %v972 = vunpack.c.l.b16 %v909
        %v973 = vunpack.c.l.b16 %v910
        %v974 = vunpack.c.l.b16 %v911
        %v975 = vunpack.c.l.b16 %v912
        %v976 = vunpack.c.l.b16 %v913
        %v977 = vunpack.c.l.b16 %v914
        %v978 = vunpack.c.l.b16 %v915
        %v979 = vunpack.c.l.b16 %v916
        %v980 = vunpack.c.l.b16 %v917
        %v981 = vunpack.c.l.b16 %v918
        %v982 = vunpack.c.l.b16 %v919
        %v983 = vunpack.c.l.b16 %v920
        %v984 = vunpack.c.l.b16 %v921
        %v985 = vunpack.c.l.b16 %v922
        %v986 = vunpack.c.l.b16 %v923
        %v987 = vunpack.c.l.b16 %v924
        %v988 = vpack.c.b16 %v973, %v972
        %v989 = vpack.c.b16 %v975, %v974
        %v990 = vpack.c.b16 %v977, %v976
        %v991 = vpack.c.b16 %v979, %v978
        %v992 = vpack.c.b16 %v981, %v980
        %v993 = vpack.c.b16 %v983, %v982
        %v994 = vpack.c.b16 %v985, %v984
        %v995 = vpack.c.b16 %v987, %v986
        %1004 = vmatprep.subr.bf16.mxu0 0
        %1005 = vmatpush1.bf16.msra.mxu0 %v988
        %1006 = vmatprep.subr.bf16.mxu0 0
        %1007 = vmatpush1.bf16.msra.mxu0 %v989
        %1008 = vmatprep.subr.bf16.mxu0 0
        %1009 = vmatpush1.bf16.msra.mxu0 %v990
        %1010 = vmatprep.subr.bf16.mxu0 0
        %1011 = vmatpush1.bf16.msra.mxu0 %v991
        %1012 = vmatprep.subr.bf16.mxu0 0
        %1013 = vmatpush1.bf16.msra.mxu0 %v992
        %1014 = vmatprep.subr.bf16.mxu0 0
        %1015 = vmatpush1.bf16.msra.mxu0 %v993
        %1016 = vmatprep.subr.bf16.mxu0 0
        %1017 = vmatpush1.bf16.msra.mxu0 %v994
        %1018 = vmatprep.subr.bf16.mxu0 0
        %1019 = vmatpush1.bf16.msra.mxu0 %v995
        %1020 = vmatprep.subr.bf16.mxu0 0
        %1021 = vmatpush1.bf16.msra.mxu0 0
        %1022 = vmatprep.subr.bf16.mxu0 0
        %1023 = vmatpush1.bf16.msra.mxu0 0
        %1024 = vmatprep.subr.bf16.mxu0 0
        %1025 = vmatpush1.bf16.msra.mxu0 0
        %1026 = vmatprep.subr.bf16.mxu0 0
        %1027 = vmatpush1.bf16.msra.mxu0 0
        %1028 = vmatprep.subr.bf16.mxu0 0
        %1029 = vmatpush1.bf16.msra.mxu0 0
        %1030 = vmatprep.subr.bf16.mxu0 0
        %1031 = vmatpush1.bf16.msra.mxu0 0
        %1032 = vmatprep.subr.bf16.mxu0 0
        %1033 = vmatpush1.bf16.msra.mxu0 0
        %1034 = vmatprep.subr.bf16.mxu0 0
        %1035 = vmatpush1.bf16.msra.mxu0 0
        %1036 = vmatprep.mubr.bf16.mxu0 0
        %1037 = vmatmul.mubr.bf16.gmra.mrb[0].mxu0 %v948
        %v1038 = vpop.f32.mrb[0].mxu0
        %v1039 = vadd.f32 %v930, %v1038
        %v1040 = vpop.f32.mrb[0].mxu0
        %v1041 = vpop.f32.mrb[0].mxu0
        %v1042 = vadd.f32 %v930, %v1041
        %v1043 = vpop.f32.mrb[0].mxu0
        %1044 = vmatprep.mubr.bf16.mxu0 0
        %1045 = vmatmul.mubr.bf16.gmra.mrb[0].mxu0 %v949
        %v1046 = vpop.f32.mrb[0].mxu0
        %v1047 = vadd.f32 %v930, %v1046
        %v1048 = vpop.f32.mrb[0].mxu0
        %v1049 = vpop.f32.mrb[0].mxu0
        %v1050 = vadd.f32 %v930, %v1049
        %v1051 = vpop.f32.mrb[0].mxu0
        %1052 = vmatprep.mubr.bf16.mxu0 0
        %1053 = vmatmul.mubr.bf16.gmra.mrb[0].mxu0 %v950
        %v1054 = vpop.f32.mrb[0].mxu0
        %v1055 = vadd.f32 %v930, %v1054
        %v1056 = vpop.f32.mrb[0].mxu0
        %v1057 = vpop.f32.mrb[0].mxu0
        %v1058 = vadd.f32 %v930, %v1057
        %v1059 = vpop.f32.mrb[0].mxu0
        %1060 = vmatprep.mubr.bf16.mxu0 0
        %1061 = vmatmul.mubr.bf16.gmra.mrb[0].mxu0 %v951
        %v1062 = vpop.f32.mrb[0].mxu0
        %v1063 = vadd.f32 %v930, %v1062
        %v1064 = vpop.f32.mrb[0].mxu0
        %v1065 = vpop.f32.mrb[0].mxu0
        %v1066 = vadd.f32 %v930, %v1065
        %v1067 = vpop.f32.mrb[0].mxu0
        %1068 = vdwg.mxu0
        %v1069 = vmul.f32 %v886, %v677
        %v1070 = vmul.f32 %v888, %v678
        %v1071 = vmul.f32 %v890, %v679
        %v1072 = vmul.f32 %v892, %v680
        %v1073 = vmul.f32 %v894, %v681
        %v1074 = vmul.f32 %v896, %v682
        %v1075 = vmul.f32 %v898, %v683
        %v1076 = vmul.f32 %v900, %v684
        %v1077 = vsub.f32 1.0, %v886
        %v1078 = vsub.f32 1.0, %v888
        %v1079 = vsub.f32 1.0, %v890
        %v1080 = vsub.f32 1.0, %v892
        %v1081 = vsub.f32 1.0, %v894
        %v1082 = vsub.f32 1.0, %v896
        %v1083 = vsub.f32 1.0, %v898
        %v1084 = vsub.f32 1.0, %v900
        %v1085 = vmul.f32 %v1077, %v1039
        %v1086 = vmul.f32 %v1078, %v1042
        %v1087 = vmul.f32 %v1079, %v1047
        %v1088 = vmul.f32 %v1080, %v1050
        %v1089 = vmul.f32 %v1081, %v1055
        %v1090 = vmul.f32 %v1082, %v1058
        %v1091 = vmul.f32 %v1083, %v1063
        %v1092 = vmul.f32 %v1084, %v1066
        %v1093 = vadd.f32 %v1069, %v1085
        %v1094 = vadd.f32 %v1070, %v1086
        %v1095 = vadd.f32 %v1071, %v1087
        %v1096 = vadd.f32 %v1072, %v1088
        %v1097 = vadd.f32 %v1073, %v1089
        %v1098 = vadd.f32 %v1074, %v1090
        %v1099 = vadd.f32 %v1075, %v1091
        %v1100 = vadd.f32 %v1076, %v1092
        %1101 = vst [vmem:[%s443] sm:$0xff] %v1093
        %1102 = vst [vmem:[%s443 + $0x8] sm:$0xff] %v1094
        %1103 = vst [vmem:[%s443 + $0x10] sm:$0xff] %v1095
        %1104 = vst [vmem:[%s443 + $0x18] sm:$0xff] %v1096
        %1105 = vst [vmem:[%s443 + $0x20] sm:$0xff] %v1097
        %1106 = vst [vmem:[%s443 + $0x28] sm:$0xff] %v1098
        %1107 = vst [vmem:[%s443 + $0x30] sm:$0xff] %v1099
        %1108 = vst [vmem:[%s443 + $0x38] sm:$0xff] %v1100
        %s1109 = sand.u32 %s220, 1
        %s1110 = scalar_lea.sflag [#allocation4], %s1109
        %s1111 = sand.u32 %s220, 1
        %s1112 = smul.addr %s1111, 64
        %s1113 = scalar_lea.vmem [#allocation12], %s1112
        // Predicated region
        $region77: #{tpu_custom_call.1} parent=51 // pred_check
          %p1114 = pneg %p230
        $region78: #{tpu_custom_call.1} parent=51 // pred_check_branch
          %1116 = sbr.rel (%p1114) target = $region80
        $region79: #{tpu_custom_call.1} parent=51 // pred_region
          %s1118 = ssub.s32 1024, 1024
          %1119 = vsyncadd %s1110, %s1118
          %s1120 = smul.addr %s29, 8
          %s1121 = smul.addr %s1120, 128
          %s1122 = scalar_lea.hbm %s8, %s1121
          %s1123 = sshll.u32 %s1113, 4
          %s1124 = int_to_ptr.vmem [resolvable:$true] %s1123
          %1129 = dma.vmem_to_hbm [thread:$0]  %s1124, 1024, %s1122, %s1110, 128, 128, 8
        $region80: #{tpu_custom_call.1} parent=51 // pred_fallthru
          _
      $region52: #{tpu_custom_call.1} parent=5 // pred_fallthru
        _
      %p1130 = scmp.le.s32.totalorder 2, %s24
      // Predicated region
      $region81: #{tpu_custom_call.1} parent=5 // pred_check
        %p1131 = pneg %p1130
      $region82: #{tpu_custom_call.1} parent=5 // pred_check_branch
        %1133 = sbr.rel (%p1131) target = $region84
      $region83: #{tpu_custom_call.1} parent=5 // pred_region
        %s1134 = ssub.s32 %s24, 2
        // Predicated region
        $region85: #{tpu_custom_call.1} parent=83 // pred_check
          %p1135 = pneg %p236
        $region86: #{tpu_custom_call.1} parent=83 // pred_check_branch
          %1137 = sbr.rel (%p1135) target = $region88
        $region87: #{tpu_custom_call.1} parent=83 // pred_region
          %s1138 = sand.u32 %s221, 1
          %s1139 = scalar_lea.sflag [#allocation4], %s1138
          %s1140 = sand.u32 %s221, 1
          %s1141 = smul.addr %s1140, 64
          %s1142 = scalar_lea.vmem [#allocation12], %s1141
          %1143 = dma.done %s1139, 1024
        $region88: #{tpu_custom_call.1} parent=83 // pred_fallthru
          _
      $region84: #{tpu_custom_call.1} parent=5 // pred_fallthru
        _
    $region6: #{tpu_custom_call.1} parent=1 // loop_footer
      %s28 = sadd.s32 1, %s24
    $region7: #{tpu_custom_call.1} parent=1 // loop_footer_branch
      %23 = sbr.rel target = $region3
    $region8: #{tpu_custom_call.1} parent=1 // loop_exit
      _
    %1144 = vsyncpa [#allocation3], 1
    %s1145 = scalar_lea.sflag [#allocation3], 1
    %1146 = vsyncpa %s1145, 1
    %1147 = vsyncpa [#allocation6], 1
    %1148 = vsyncpa [#allocation10], 1
    %s1149 = scalar_lea.sflag [#allocation10], 1
    %1150 = vsyncpa %s1149, 1
    %1151 = vsyncpa [#allocation4], 1
    %s1152 = scalar_lea.sflag [#allocation4], 1
    %1153 = vsyncpa %s1152, 1

</llo_original>
